<compile_context>
chip_gen: v6e
topology: v6e:2x2x1
jax: 0.10.0
libtpu: 0.0.40
codegen_flags: <defaults>
</compile_context>

<pallas_src>
import jax
import jax.numpy as jnp
import numpy as np
from jax.experimental import pallas as pl
from jax.experimental.pallas import tpu as pltpu


# ----------------------------------------------------------------------------
# Kernel
# ----------------------------------------------------------------------------
def _pe_add_kernel(x_ref, pe_ref, o_ref):
    # x_ref: (TS, B, D), pe_ref: (TS, 1, D) -> broadcast over batch, o_ref: (TS, B, D)
    # Single full-tile load + VPU add + full-tile store; nothing else on the
    # critical path of this memory-bound kernel.
    o_ref[...] = x_ref[...] + pe_ref[...]


def _pick_seq_tile(S, B, D, itemsize=4, budget_bytes=4 << 20):
    """Largest TS dividing S whose double-buffered blocks fit `budget_bytes`,
    preferring a grid of >= 2 steps (v7x has 2 TensorCores per chip)."""
    divisors = [ts for ts in range(1, S + 1) if S % ts == 0]
    fitting = [
        ts for ts in divisors
        # double-buffered x block + out block + pe block
        if 2 * itemsize * (2 * ts * B * D + ts * D) <= budget_bytes
    ]
    if not fitting:
        return 1
    best = max(fitting)
    if best == S and S > 1:
        proper = [ts for ts in fitting if ts < S]
        if proper:
            best = max(proper)  # keep at least 2 grid steps when possible
    return best


# ----------------------------------------------------------------------------
# Wrapper
# ----------------------------------------------------------------------------
def learnable_positional_encoding(x, pe):
    """x: (S, B, D), pe: (max_len, 1, D) -> (S, B, D). Eval-mode forward (dropout = identity)."""
    S, B, D = x.shape
    max_len = pe.shape[0]
    assert S <= max_len and pe.shape == (max_len, 1, D), (x.shape, pe.shape)

    TS = _pick_seq_tile(S, B, D, jnp.dtype(x.dtype).itemsize)
    grid = (S // TS,)

    return pl.pallas_call(
        _pe_add_kernel,
        out_shape=jax.ShapeDtypeStruct((S, B, D), x.dtype),
        grid_spec=pltpu.PrefetchScalarGridSpec(
            num_scalar_prefetch=0,
            grid=grid,
            in_specs=[
                # x: dense (TS, B, D) tile per step; (B, D) equal the full
                # array dims -> (8,128) BlockSpec constraint satisfied.
                pl.BlockSpec((TS, B, D), lambda i: (i, 0, 0)),
                # pe: only rows [0, S) are ever DMA'd (grid covers i*TS < S);
                # broadcast over batch happens in-kernel, so pe HBM traffic is
                # just S*D elements, not S*B*D.
                pl.BlockSpec((TS, 1, D), lambda i: (i, 0, 0)),
            ],
            out_specs=pl.BlockSpec((TS, B, D), lambda i: (i, 0, 0)),
        ),
        compiler_params=pltpu.CompilerParams(
            # Seq blocks are fully independent -> megacore shard on v7x.
            dimension_semantics=("parallel",),
        ),
    )(x, pe)


# ----------------------------------------------------------------------------
if __name__ == "__main__":
    # [sequence length, batch size, embed dim] — d_model kept lane-dense (128)
    # so the HBM writeback uses unmasked full-lane stores.
    S, B, D, max_len = 64, 4, 128, 1024

    key = jax.random.PRNGKey(0)
    kx, kpe = jax.random.split(key)
    x = jax.random.normal(kx, (S, B, D), jnp.float32)
    # nn.init.uniform_(self.pe, -0.02, 0.02)
    pe = jax.random.uniform(kpe, (max_len, 1, D), jnp.float32, -0.02, 0.02)

    y = learnable_positional_encoding(x, pe)
    y = jax.block_until_ready(y)

    assert y.shape == (S, B, D)
    # Reference: x + pe[:S] (broadcast over batch); dropout is identity in eval mode.
    ref = np.asarray(x) + np.asarray(pe)[:S]
    np.testing.assert_allclose(np.asarray(y), ref, rtol=1e-6, atol=1e-6)

    print("KERNEL_OK")
</pallas_src>

<mosaic_0001>
module attributes {stable_mosaic.version = 11 : i64} {
  func.func @_pe_add_kernel(%arg0: i32, %arg1: memref<32x4x128xf32, #tpu.memory_space<vmem>>, %arg2: memref<32x1x128xf32, #tpu.memory_space<vmem>>, %arg3: memref<32x4x128xf32, #tpu.memory_space<vmem>>) attributes {dimension_semantics = [#tpu.dimension_semantics<parallel>], iteration_bounds = array<i64: 2>, scalar_prefetch = 0 : i64, scratch_operands = 0 : i64, tpu.core_type = #tpu.core_type<tc>, window_params = [{transform_indices = @transform_0, window_bounds = array<i64: 32, 4, 128>}, {transform_indices = @transform_1, window_bounds = array<i64: 32, 1, 128>}, {transform_indices = @transform_2, window_bounds = array<i64: 32, 4, 128>}]} {
    %c0 = arith.constant 0 : index
    %c0_0 = arith.constant 0 : index
    %c0_1 = arith.constant 0 : index
    %0 = vector.load %arg1[%c0, %c0_0, %c0_1] : memref<32x4x128xf32, #tpu.memory_space<vmem>>, vector<32x4x128xf32>
    %c0_2 = arith.constant 0 : index
    %c0_3 = arith.constant 0 : index
    %c0_4 = arith.constant 0 : index
    %1 = vector.load %arg2[%c0_2, %c0_3, %c0_4] : memref<32x1x128xf32, #tpu.memory_space<vmem>>, vector<32x1x128xf32>
    %2 = vector.broadcast %1 : vector<32x1x128xf32> to vector<32x4x128xf32>
    %3 = arith.addf %0, %2 : vector<32x4x128xf32>
    %c0_5 = arith.constant 0 : index
    %c0_6 = arith.constant 0 : index
    %c0_7 = arith.constant 0 : index
    %4 = vector.load %arg3[%c0_5, %c0_6, %c0_7] : memref<32x4x128xf32, #tpu.memory_space<vmem>>, vector<32x4x128xf32>
    tpu.vector_store %arg3[%c0_5, %c0_6, %c0_7], %3 {strides = array<i32>} : memref<32x4x128xf32, #tpu.memory_space<vmem>>, vector<32x4x128xf32>,
    return
  }
  func.func @transform_0(%arg0: i32) -> (i32, i32, i32) {
    %c0_i32 = arith.constant 0 : i32
    %c0_i32_0 = arith.constant 0 : i32
    %c0_i32_1 = arith.constant 0 : i32
    return %arg0, %c0_i32, %c0_i32_0 : i32, i32, i32
  }
  func.func @transform_1(%arg0: i32) -> (i32, i32, i32) {
    %c0_i32 = arith.constant 0 : i32
    %c0_i32_0 = arith.constant 0 : i32
    %c0_i32_1 = arith.constant 0 : i32
    return %arg0, %c0_i32, %c0_i32_0 : i32, i32, i32
  }
  func.func @transform_2(%arg0: i32) -> (i32, i32, i32) {
    %c0_i32 = arith.constant 0 : i32
    %c0_i32_0 = arith.constant 0 : i32
    %c0_i32_1 = arith.constant 0 : i32
    return %arg0, %c0_i32, %c0_i32_0 : i32, i32, i32
  }
}

</mosaic_0001>

<llo_original>
// kernel: tpu_custom_call.1
$region0: #{tpu_custom_call.1}
  #allocation0 [shape = 'u32[]', space=smem, size = 0x4, offset = 0x4, fixed_abs, tag = 'smem constant byte address 0x4 - core index']
  #allocation1 [shape = 'u32[144,128]{1,0:T(1,128)}', space=vmem, size = 0x12000, scoped, tag = 'internal scratch']
  %s0 = inlined_call_operand.hbm [shape: f32[64,4,128], index: 0, kind: input, shape index: {}]
  %s1 = inlined_call_operand.hbm [shape: f32[1024,1,128], index: 1, kind: input, shape index: {}]
  %s2 = inlined_call_operand.hbm [shape: f32[64,4,128], index: 2, kind: output, shape index: {}]
  %s3 = sld [smem:[#allocation0]]
  $region49: #{tpu_custom_call.1} parent=0
    _
  %s5 = ssub.s32 1, %s3
  %s6 = scalar_select 0, %s5, %s3
  $region1: #{tpu_custom_call.1} parent=0
    #allocation2 [shape = 'u8[131072]{0}', space=vmem, size = 0x20000, scoped, tag = 'input window, operand 0']
    #allocation3 [shape = 's32[2]{0}', space=sflag, size = 0x8, scoped, tag = 'scoped memory for tpu_custom_call.1']
    #allocation4 [shape = 's32[2]{0}', space=sflag, size = 0x8, scoped, tag = 'scoped memory for tpu_custom_call.1']
    #allocation5 [shape = 'u8[32768]{0}', space=vmem, size = 0x8000, scoped, tag = 'input window, operand 1']
    #allocation6 [shape = 's32[2]{0}', space=sflag, size = 0x8, scoped, tag = 'scoped memory for tpu_custom_call.1']
    #allocation7 [shape = 'u8[131072]{0}', space=vmem, size = 0x20000, scoped, tag = 'output window, operand 0']
    %7 = vsyncpa [#allocation3], 0
    %s8 = scalar_lea.sflag [#allocation3], 1
    %9 = vsyncpa %s8, 0
    %10 = vsyncpa [#allocation6], 0
    %s11 = scalar_lea.sflag [#allocation6], 1
    %12 = vsyncpa %s11, 0
    %13 = vsyncpa [#allocation4], 0
    %s14 = scalar_lea.sflag [#allocation4], 1
    %15 = vsyncpa %s14, 0
    loop: start=0, step=1, limit=4
    $region2: #{tpu_custom_call.1} parent=1 // loop_pre_header
      _
    $region3: #{tpu_custom_call.1} parent=1 // loop_header
      %s17 = sphi 0, %s21
      %p18 = scmp.ge.s32.totalorder %s17, 4
      %s27 = sphi 0, %s29
      %s30 = sphi 0, %s27
      %s31 = sphi 0, %s30
      %s47 = sphi 0, %s31
      %s53 = sphi 0, %s55
      %s56 = sphi 0, %s53
      %s57 = sphi 0, %s56
      %s73 = sphi 0, %s57
      %s79 = sphi 0, %s81
      %s82 = sphi 0, %s79
      %s83 = sphi 0, %s82
      %s99 = sphi 0, %s83
    $region4: #{tpu_custom_call.1} parent=1 // loop_header_branch
      %20 = sbr.rel (%p18) target = $region8
    $region5: #{tpu_custom_call.1} parent=1 // loop_body
      %s22 = ssub.s32 %s17, 1
      %s23 = ssub.s32 %s17, 2
      %s24 = sadd.s32 %s17, 1
      %s25 = ssub.s32 %s17, %s24
      %p26 = scmp.eq.s32.totalorder %s25, 0
      %s28 = sadd.s32 %s27, 1
      %s29 = scalar_select %p26, %s27, %s28
      %p32 = pneg %p26
      %p33 = scmp.eq.s32.totalorder %s17, 1
      %p34 = por %p32, %p33
      %p35 = scmp.ne.s32.totalorder %s27, %s30
      %p36 = scmp.eq.s32.totalorder %s17, 0
      %p37 = por %p35, %p36
      %p38 = scmp.ne.s32.totalorder %s27, %s30
      %p39 = scmp.eq.s32.totalorder %s22, 1
      %p40 = por %p38, %p39
      %p41 = scmp.ne.s32.totalorder %s30, %s31
      %p42 = scmp.eq.s32.totalorder %s22, 0
      %p43 = por %p41, %p42
      %p44 = scmp.ne.s32.totalorder %s30, %s31
      %p45 = scmp.eq.s32.totalorder %s23, 1
      %p46 = por %p44, %p45
      %p48 = scmp.ne.s32.totalorder %s31, %s47
      %p49 = scmp.eq.s32.totalorder %s23, 0
      %p50 = por %p48, %p49
      %s51 = ssub.s32 %s17, %s24
      %p52 = scmp.eq.s32.totalorder %s51, 0
      %s54 = sadd.s32 %s53, 1
      %s55 = scalar_select %p52, %s53, %s54
      %p58 = pneg %p52
      %p59 = scmp.eq.s32.totalorder %s17, 1
      %p60 = por %p58, %p59
      %p61 = scmp.ne.s32.totalorder %s53, %s56
      %p62 = scmp.eq.s32.totalorder %s17, 0
      %p63 = por %p61, %p62
      %p64 = scmp.ne.s32.totalorder %s53, %s56
      %p65 = scmp.eq.s32.totalorder %s22, 1
      %p66 = por %p64, %p65
      %p67 = scmp.ne.s32.totalorder %s56, %s57
      %p68 = scmp.eq.s32.totalorder %s22, 0
      %p69 = por %p67, %p68
      %p70 = scmp.ne.s32.totalorder %s56, %s57
      %p71 = scmp.eq.s32.totalorder %s23, 1
      %p72 = por %p70, %p71
      %p74 = scmp.ne.s32.totalorder %s57, %s73
      %p75 = scmp.eq.s32.totalorder %s23, 0
      %p76 = por %p74, %p75
      %s77 = ssub.s32 %s17, %s24
      %p78 = scmp.eq.s32.totalorder %s77, 0
      %s80 = sadd.s32 %s79, 1
      %s81 = scalar_select %p78, %s79, %s80
      %p84 = pneg %p78
      %p85 = scmp.eq.s32.totalorder %s17, 1
      %p86 = por %p84, %p85
      %p87 = scmp.ne.s32.totalorder %s79, %s82
      %p88 = scmp.eq.s32.totalorder %s17, 0
      %p89 = por %p87, %p88
      %p90 = scmp.ne.s32.totalorder %s79, %s82
      %p91 = scmp.eq.s32.totalorder %s22, 1
      %p92 = por %p90, %p91
      %p93 = scmp.ne.s32.totalorder %s82, %s83
      %p94 = scmp.eq.s32.totalorder %s22, 0
      %p95 = por %p93, %p94
      %p96 = scmp.ne.s32.totalorder %s82, %s83
      %p97 = scmp.eq.s32.totalorder %s23, 1
      %p98 = por %p96, %p97
      %p100 = scmp.ne.s32.totalorder %s83, %s99
      %p101 = scmp.eq.s32.totalorder %s23, 0
      %p102 = por %p100, %p101
      %p103 = scmp.le.s32.totalorder 1, %s17
      %p104 = scmp.lt.s32.totalorder %s17, 3
      %p105 = pnand %p103, %p104
      %p106 = pneg %p105
      // Predicated region
      $region9: #{tpu_custom_call.1} parent=5 // pred_check
        _
      $region10: #{tpu_custom_call.1} parent=5 // pred_check_branch
        %108 = sbr.rel (%p105) target = $region12
      $region11: #{tpu_custom_call.1} parent=5 // pred_region
        %s109 = ssub.s32 %s17, 1
      $region12: #{tpu_custom_call.1} parent=5 // pred_fallthru
        _
      %p110 = scmp.lt.s32.totalorder %s17, 2
      // Predicated region
      $region13: #{tpu_custom_call.1} parent=5 // pred_check
        %p111 = pneg %p110
      $region14: #{tpu_custom_call.1} parent=5 // pred_check_branch
        %113 = sbr.rel (%p111) target = $region16
      $region15: #{tpu_custom_call.1} parent=5 // pred_region
        // Predicated region
        $region17: #{tpu_custom_call.1} parent=15 // pred_check
          %p114 = pneg %p37
        $region18: #{tpu_custom_call.1} parent=15 // pred_check_branch
          %116 = sbr.rel (%p114) target = $region20
        $region19: #{tpu_custom_call.1} parent=15 // pred_region
          %s117 = sand.u32 %s27, 1
          %s118 = scalar_lea.sflag [#allocation3], %s117
          %s119 = sand.u32 %s27, 1
          %s120 = smul.addr %s119, 128
          %s121 = scalar_lea.vmem [#allocation2], %s120
          %s122 = smul.u32 32, %s17
          %s124 = ssub.s32 2048, 2048
          %125 = vsyncadd %s118, %s124
          %s126 = smul.addr %s122, 64
          %s127 = scalar_lea.hbm %s0, %s126
          %s128 = sshll.u32 %s121, 4
          %s129 = int_to_ptr.vmem [resolvable:$true] %s128
          %134 = dma.hbm_to_vmem [thread:$0]  %s127, 2048, %s129, %s118, 64, 64, 4
        $region20: #{tpu_custom_call.1} parent=15 // pred_fallthru
          _
        // Predicated region
        $region21: #{tpu_custom_call.1} parent=15 // pred_check
          %p135 = pneg %p63
        $region22: #{tpu_custom_call.1} parent=15 // pred_check_branch
          %137 = sbr.rel (%p135) target = $region24
        $region23: #{tpu_custom_call.1} parent=15 // pred_region
          %s138 = sand.u32 %s53, 1
          %s139 = scalar_lea.sflag [#allocation6], %s138
          %s140 = sand.u32 %s53, 1
          %s141 = smul.addr %s140, 32
          %s142 = scalar_lea.vmem [#allocation5], %s141
          %s143 = smul.u32 32, %s17
          %s145 = ssub.s32 512, 512
          %146 = vsyncadd %s139, %s145
          %s147 = smul.addr %s143, 16
          %s148 = scalar_lea.hbm %s1, %s147
          %s149 = sshll.u32 %s142, 4
          %s150 = int_to_ptr.vmem [resolvable:$true] %s149
          %155 = dma.hbm_to_vmem [thread:$0]  %s148, 512, %s150, %s139, 16, 16, 1
        $region24: #{tpu_custom_call.1} parent=15 // pred_fallthru
          _
      $region16: #{tpu_custom_call.1} parent=5 // pred_fallthru
        _
      %p156 = scmp.le.s32.totalorder 1, %s17
      %p157 = scmp.lt.s32.totalorder %s17, 3
      %p158 = pnand %p156, %p157
      %p159 = pneg %p158
      // Predicated region
      $region25: #{tpu_custom_call.1} parent=5 // pred_check
        _
      $region26: #{tpu_custom_call.1} parent=5 // pred_check_branch
        %161 = sbr.rel (%p158) target = $region28
      $region27: #{tpu_custom_call.1} parent=5 // pred_region
        %s162 = ssub.s32 %s17, 1
        %s163 = sand.u32 %s30, 1
        %s164 = scalar_lea.sflag [#allocation3], %s163
        %s165 = sand.u32 %s30, 1
        %s166 = smul.addr %s165, 128
        %s167 = scalar_lea.vmem [#allocation2], %s166
        // Predicated region
        $region29: #{tpu_custom_call.1} parent=27 // pred_check
          %p168 = pneg %p43
        $region30: #{tpu_custom_call.1} parent=27 // pred_check_branch
          %170 = sbr.rel (%p168) target = $region32
        $region31: #{tpu_custom_call.1} parent=27 // pred_region
          %171 = dma.done %s164, 2048
        $region32: #{tpu_custom_call.1} parent=27 // pred_fallthru
          _
        %s172 = sand.u32 %s56, 1
        %s173 = scalar_lea.sflag [#allocation6], %s172
        %s174 = sand.u32 %s56, 1
        %s175 = smul.addr %s174, 32
        %s176 = scalar_lea.vmem [#allocation5], %s175
        // Predicated region
        $region33: #{tpu_custom_call.1} parent=27 // pred_check
          %p177 = pneg %p69
        $region34: #{tpu_custom_call.1} parent=27 // pred_check_branch
          %179 = sbr.rel (%p177) target = $region36
        $region35: #{tpu_custom_call.1} parent=27 // pred_region
          %180 = dma.done %s173, 512
        $region36: #{tpu_custom_call.1} parent=27 // pred_fallthru
          _
        %s181 = sand.u32 %s30, 1
        %s182 = scalar_lea.sflag [#allocation3], %s181
        %s183 = sand.u32 %s30, 1
        %s184 = smul.addr %s183, 128
        %s185 = scalar_lea.vmem [#allocation2], %s184
        %p186 = pneg %p43
        %p187 = pneg %p40
        %s188 = sand.u32 %s56, 1
        %s189 = scalar_lea.sflag [#allocation6], %s188
        %s190 = sand.u32 %s56, 1
        %s191 = smul.addr %s190, 32
        %s192 = scalar_lea.vmem [#allocation5], %s191
        %p193 = pneg %p69
        %p194 = pneg %p66
        %p195 = pneg %p95
        %p196 = pneg %p92
        %s197 = sand.u32 %s82, 1
        %s198 = scalar_lea.sflag [#allocation4], %s197
        %s199 = sand.u32 %s82, 1
        %s200 = smul.addr %s199, 128
        %s201 = scalar_lea.vmem [#allocation7], %s200
        %s202 = smul.u32 32, %s22
        %s203 = smul.u32 32, %s22
        %s204 = smul.u32 32, %s22
        %v205 = vld [vmem:[%s167] sm:$0xf]
        %v206 = vld [vmem:[%s167 + $0x4] sm:$0xf]
        %v207 = vld [vmem:[%s167 + $0x8] sm:$0xf]
        %v208 = vld [vmem:[%s167 + $0xc] sm:$0xf]
        %v209 = vld [vmem:[%s167 + $0x10] sm:$0xf]
        %v210 = vld [vmem:[%s167 + $0x14] sm:$0xf]
        %v211 = vld [vmem:[%s167 + $0x18] sm:$0xf]
        %v212 = vld [vmem:[%s167 + $0x1c] sm:$0xf]
        %v213 = vld [vmem:[%s167 + $0x20] sm:$0xf]
        %v214 = vld [vmem:[%s167 + $0x24] sm:$0xf]
        %v215 = vld [vmem:[%s167 + $0x28] sm:$0xf]
        %v216 = vld [vmem:[%s167 + $0x2c] sm:$0xf]
        %v217 = vld [vmem:[%s167 + $0x30] sm:$0xf]
        %v218 = vld [vmem:[%s167 + $0x34] sm:$0xf]
        %v219 = vld [vmem:[%s167 + $0x38] sm:$0xf]
        %v220 = vld [vmem:[%s167 + $0x3c] sm:$0xf]
        %v221 = vld [vmem:[%s167 + $0x40] sm:$0xf]
        %v222 = vld [vmem:[%s167 + $0x44] sm:$0xf]
        %v223 = vld [vmem:[%s167 + $0x48] sm:$0xf]
        %v224 = vld [vmem:[%s167 + $0x4c] sm:$0xf]
        %v225 = vld [vmem:[%s167 + $0x50] sm:$0xf]
        %v226 = vld [vmem:[%s167 + $0x54] sm:$0xf]
        %v227 = vld [vmem:[%s167 + $0x58] sm:$0xf]
        %v228 = vld [vmem:[%s167 + $0x5c] sm:$0xf]
        %v229 = vld [vmem:[%s167 + $0x60] sm:$0xf]
        %v230 = vld [vmem:[%s167 + $0x64] sm:$0xf]
        %v231 = vld [vmem:[%s167 + $0x68] sm:$0xf]
        %v232 = vld [vmem:[%s167 + $0x6c] sm:$0xf]
        %v233 = vld [vmem:[%s167 + $0x70] sm:$0xf]
        %v234 = vld [vmem:[%s167 + $0x74] sm:$0xf]
        %v235 = vld [vmem:[%s167 + $0x78] sm:$0xf]
        %v236 = vld [vmem:[%s167 + $0x7c] sm:$0xf]
        %v237 = vld [vmem:[%s176] sm:$0x1]
        %v238 = vld [vmem:[%s176 + $0x1] sm:$0x1]
        %v239 = vld [vmem:[%s176 + $0x2] sm:$0x1]
        %v240 = vld [vmem:[%s176 + $0x3] sm:$0x1]
        %v241 = vld [vmem:[%s176 + $0x4] sm:$0x1]
        %v242 = vld [vmem:[%s176 + $0x5] sm:$0x1]
        %v243 = vld [vmem:[%s176 + $0x6] sm:$0x1]
        %v244 = vld [vmem:[%s176 + $0x7] sm:$0x1]
        %v245 = vld [vmem:[%s176 + $0x8] sm:$0x1]
        %v246 = vld [vmem:[%s176 + $0x9] sm:$0x1]
        %v247 = vld [vmem:[%s176 + $0xa] sm:$0x1]
        %v248 = vld [vmem:[%s176 + $0xb] sm:$0x1]
        %v249 = vld [vmem:[%s176 + $0xc] sm:$0x1]
        %v250 = vld [vmem:[%s176 + $0xd] sm:$0x1]
        %v251 = vld [vmem:[%s176 + $0xe] sm:$0x1]
        %v252 = vld [vmem:[%s176 + $0xf] sm:$0x1]
        %v253 = vld [vmem:[%s176 + $0x10] sm:$0x1]
        %v254 = vld [vmem:[%s176 + $0x11] sm:$0x1]
        %v255 = vld [vmem:[%s176 + $0x12] sm:$0x1]
        %v256 = vld [vmem:[%s176 + $0x13] sm:$0x1]
        %v257 = vld [vmem:[%s176 + $0x14] sm:$0x1]
        %v258 = vld [vmem:[%s176 + $0x15] sm:$0x1]
        %v259 = vld [vmem:[%s176 + $0x16] sm:$0x1]
        %v260 = vld [vmem:[%s176 + $0x17] sm:$0x1]
        %v261 = vld [vmem:[%s176 + $0x18] sm:$0x1]
        %v262 = vld [vmem:[%s176 + $0x19] sm:$0x1]
        %v263 = vld [vmem:[%s176 + $0x1a] sm:$0x1]
        %v264 = vld [vmem:[%s176 + $0x1b] sm:$0x1]
        %v265 = vld [vmem:[%s176 + $0x1c] sm:$0x1]
        %v266 = vld [vmem:[%s176 + $0x1d] sm:$0x1]
        %v267 = vld [vmem:[%s176 + $0x1e] sm:$0x1]
        %v268 = vld [vmem:[%s176 + $0x1f] sm:$0x1]
        %v301 = vlaneseq
        %v302 = vshrl.u32 %v301, 7
        %v303 = vsub.s32 0, %v302
        %v304 = vrot.slane %v237, %v303
        %v305 = vlaneseq
        %v306 = vshrl.u32 %v305, 7
        %v307 = vsub.s32 0, %v306
        %v308 = vrot.slane %v238, %v307
        %v309 = vlaneseq
        %v310 = vshrl.u32 %v309, 7
        %v311 = vsub.s32 0, %v310
        %v312 = vrot.slane %v239, %v311
        %v313 = vlaneseq
        %v314 = vshrl.u32 %v313, 7
        %v315 = vsub.s32 0, %v314
        %v316 = vrot.slane %v240, %v315
        %v317 = vlaneseq
        %v318 = vshrl.u32 %v317, 7
        %v319 = vsub.s32 0, %v318
        %v320 = vrot.slane %v241, %v319
        %v321 = vlaneseq
        %v322 = vshrl.u32 %v321, 7
        %v323 = vsub.s32 0, %v322
        %v324 = vrot.slane %v242, %v323
        %v325 = vlaneseq
        %v326 = vshrl.u32 %v325, 7
        %v327 = vsub.s32 0, %v326
        %v328 = vrot.slane %v243, %v327
        %v329 = vlaneseq
        %v330 = vshrl.u32 %v329, 7
        %v331 = vsub.s32 0, %v330
        %v332 = vrot.slane %v244, %v331
        %v333 = vlaneseq
        %v334 = vshrl.u32 %v333, 7
        %v335 = vsub.s32 0, %v334
        %v336 = vrot.slane %v245, %v335
        %v337 = vlaneseq
        %v338 = vshrl.u32 %v337, 7
        %v339 = vsub.s32 0, %v338
        %v340 = vrot.slane %v246, %v339
        %v341 = vlaneseq
        %v342 = vshrl.u32 %v341, 7
        %v343 = vsub.s32 0, %v342
        %v344 = vrot.slane %v247, %v343
        %v345 = vlaneseq
        %v346 = vshrl.u32 %v345, 7
        %v347 = vsub.s32 0, %v346
        %v348 = vrot.slane %v248, %v347
        %v349 = vlaneseq
        %v350 = vshrl.u32 %v349, 7
        %v351 = vsub.s32 0, %v350
        %v352 = vrot.slane %v249, %v351
        %v353 = vlaneseq
        %v354 = vshrl.u32 %v353, 7
        %v355 = vsub.s32 0, %v354
        %v356 = vrot.slane %v250, %v355
        %v357 = vlaneseq
        %v358 = vshrl.u32 %v357, 7
        %v359 = vsub.s32 0, %v358
        %v360 = vrot.slane %v251, %v359
        %v361 = vlaneseq
        %v362 = vshrl.u32 %v361, 7
        %v363 = vsub.s32 0, %v362
        %v364 = vrot.slane %v252, %v363
        %v365 = vlaneseq
        %v366 = vshrl.u32 %v365, 7
        %v367 = vsub.s32 0, %v366
        %v368 = vrot.slane %v253, %v367
        %v369 = vlaneseq
        %v370 = vshrl.u32 %v369, 7
        %v371 = vsub.s32 0, %v370
        %v372 = vrot.slane %v254, %v371
        %v373 = vlaneseq
        %v374 = vshrl.u32 %v373, 7
        %v375 = vsub.s32 0, %v374
        %v376 = vrot.slane %v255, %v375
        %v377 = vlaneseq
        %v378 = vshrl.u32 %v377, 7
        %v379 = vsub.s32 0, %v378
        %v380 = vrot.slane %v256, %v379
        %v381 = vlaneseq
        %v382 = vshrl.u32 %v381, 7
        %v383 = vsub.s32 0, %v382
        %v384 = vrot.slane %v257, %v383
        %v385 = vlaneseq
        %v386 = vshrl.u32 %v385, 7
        %v387 = vsub.s32 0, %v386
        %v388 = vrot.slane %v258, %v387
        %v389 = vlaneseq
        %v390 = vshrl.u32 %v389, 7
        %v391 = vsub.s32 0, %v390
        %v392 = vrot.slane %v259, %v391
        %v393 = vlaneseq
        %v394 = vshrl.u32 %v393, 7
        %v395 = vsub.s32 0, %v394
        %v396 = vrot.slane %v260, %v395
        %v397 = vlaneseq
        %v398 = vshrl.u32 %v397, 7
        %v399 = vsub.s32 0, %v398
        %v400 = vrot.slane %v261, %v399
        %v401 = vlaneseq
        %v402 = vshrl.u32 %v401, 7
        %v403 = vsub.s32 0, %v402
        %v404 = vrot.slane %v262, %v403
        %v405 = vlaneseq
        %v406 = vshrl.u32 %v405, 7
        %v407 = vsub.s32 0, %v406
        %v408 = vrot.slane %v263, %v407
        %v409 = vlaneseq
        %v410 = vshrl.u32 %v409, 7
        %v411 = vsub.s32 0, %v410
        %v412 = vrot.slane %v264, %v411
        %v413 = vlaneseq
        %v414 = vshrl.u32 %v413, 7
        %v415 = vsub.s32 0, %v414
        %v416 = vrot.slane %v265, %v415
        %v417 = vlaneseq
        %v418 = vshrl.u32 %v417, 7
        %v419 = vsub.s32 0, %v418
        %v420 = vrot.slane %v266, %v419
        %v421 = vlaneseq
        %v422 = vshrl.u32 %v421, 7
        %v423 = vsub.s32 0, %v422
        %v424 = vrot.slane %v267, %v423
        %v425 = vlaneseq
        %v426 = vshrl.u32 %v425, 7
        %v427 = vsub.s32 0, %v426
        %v428 = vrot.slane %v268, %v427
        %v461 = vadd.f32 %v205, %v304
        %v462 = vadd.f32 %v206, %v308
        %v463 = vadd.f32 %v207, %v312
        %v464 = vadd.f32 %v208, %v316
        %v465 = vadd.f32 %v209, %v320
        %v466 = vadd.f32 %v210, %v324
        %v467 = vadd.f32 %v211, %v328
        %v468 = vadd.f32 %v212, %v332
        %v469 = vadd.f32 %v213, %v336
        %v470 = vadd.f32 %v214, %v340
        %v471 = vadd.f32 %v215, %v344
        %v472 = vadd.f32 %v216, %v348
        %v473 = vadd.f32 %v217, %v352
        %v474 = vadd.f32 %v218, %v356
        %v475 = vadd.f32 %v219, %v360
        %v476 = vadd.f32 %v220, %v364
        %v477 = vadd.f32 %v221, %v368
        %v478 = vadd.f32 %v222, %v372
        %v479 = vadd.f32 %v223, %v376
        %v480 = vadd.f32 %v224, %v380
        %v481 = vadd.f32 %v225, %v384
        %v482 = vadd.f32 %v226, %v388
        %v483 = vadd.f32 %v227, %v392
        %v484 = vadd.f32 %v228, %v396
        %v485 = vadd.f32 %v229, %v400
        %v486 = vadd.f32 %v230, %v404
        %v487 = vadd.f32 %v231, %v408
        %v488 = vadd.f32 %v232, %v412
        %v489 = vadd.f32 %v233, %v416
        %v490 = vadd.f32 %v234, %v420
        %v491 = vadd.f32 %v235, %v424
        %v492 = vadd.f32 %v236, %v428
        %493 = vst [vmem:[%s201] sm:$0xf] %v461
        %494 = vst [vmem:[%s201 + $0x4] sm:$0xf] %v462
        %495 = vst [vmem:[%s201 + $0x8] sm:$0xf] %v463
        %496 = vst [vmem:[%s201 + $0xc] sm:$0xf] %v464
        %497 = vst [vmem:[%s201 + $0x10] sm:$0xf] %v465
        %498 = vst [vmem:[%s201 + $0x14] sm:$0xf] %v466
        %499 = vst [vmem:[%s201 + $0x18] sm:$0xf] %v467
        %500 = vst [vmem:[%s201 + $0x1c] sm:$0xf] %v468
        %501 = vst [vmem:[%s201 + $0x20] sm:$0xf] %v469
        %502 = vst [vmem:[%s201 + $0x24] sm:$0xf] %v470
        %503 = vst [vmem:[%s201 + $0x28] sm:$0xf] %v471
        %504 = vst [vmem:[%s201 + $0x2c] sm:$0xf] %v472
        %505 = vst [vmem:[%s201 + $0x30] sm:$0xf] %v473
        %506 = vst [vmem:[%s201 + $0x34] sm:$0xf] %v474
        %507 = vst [vmem:[%s201 + $0x38] sm:$0xf] %v475
        %508 = vst [vmem:[%s201 + $0x3c] sm:$0xf] %v476
        %509 = vst [vmem:[%s201 + $0x40] sm:$0xf] %v477
        %510 = vst [vmem:[%s201 + $0x44] sm:$0xf] %v478
        %511 = vst [vmem:[%s201 + $0x48] sm:$0xf] %v479
        %512 = vst [vmem:[%s201 + $0x4c] sm:$0xf] %v480
        %513 = vst [vmem:[%s201 + $0x50] sm:$0xf] %v481
        %514 = vst [vmem:[%s201 + $0x54] sm:$0xf] %v482
        %515 = vst [vmem:[%s201 + $0x58] sm:$0xf] %v483
        %516 = vst [vmem:[%s201 + $0x5c] sm:$0xf] %v484
        %517 = vst [vmem:[%s201 + $0x60] sm:$0xf] %v485
        %518 = vst [vmem:[%s201 + $0x64] sm:$0xf] %v486
        %519 = vst [vmem:[%s201 + $0x68] sm:$0xf] %v487
        %520 = vst [vmem:[%s201 + $0x6c] sm:$0xf] %v488
        %521 = vst [vmem:[%s201 + $0x70] sm:$0xf] %v489
        %522 = vst [vmem:[%s201 + $0x74] sm:$0xf] %v490
        %523 = vst [vmem:[%s201 + $0x78] sm:$0xf] %v491
        %524 = vst [vmem:[%s201 + $0x7c] sm:$0xf] %v492
        %s525 = sand.u32 %s82, 1
        %s526 = scalar_lea.sflag [#allocation4], %s525
        %s527 = sand.u32 %s82, 1
        %s528 = smul.addr %s527, 128
        %s529 = scalar_lea.vmem [#allocation7], %s528
        // Predicated region
        $region37: #{tpu_custom_call.1} parent=27 // pred_check
          %p530 = pneg %p92
        $region38: #{tpu_custom_call.1} parent=27 // pred_check_branch
          %532 = sbr.rel (%p530) target = $region40
        $region39: #{tpu_custom_call.1} parent=27 // pred_region
          %s533 = smul.u32 32, %s22
          %s535 = ssub.s32 2048, 2048
          %536 = vsyncadd %s526, %s535
          %s537 = smul.addr %s533, 64
          %s538 = scalar_lea.hbm %s2, %s537
          %s539 = sshll.u32 %s529, 4
          %s540 = int_to_ptr.vmem [resolvable:$true] %s539
          %545 = dma.vmem_to_hbm [thread:$0]  %s540, 2048, %s538, %s526, 64, 64, 4
        $region40: #{tpu_custom_call.1} parent=27 // pred_fallthru
          _
      $region28: #{tpu_custom_call.1} parent=5 // pred_fallthru
        _
      %p546 = scmp.le.s32.totalorder 2, %s17
      // Predicated region
      $region41: #{tpu_custom_call.1} parent=5 // pred_check
        %p547 = pneg %p546
      $region42: #{tpu_custom_call.1} parent=5 // pred_check_branch
        %549 = sbr.rel (%p547) target = $region44
      $region43: #{tpu_custom_call.1} parent=5 // pred_region
        %s550 = ssub.s32 %s17, 2
        // Predicated region
        $region45: #{tpu_custom_call.1} parent=43 // pred_check
          %p551 = pneg %p98
        $region46: #{tpu_custom_call.1} parent=43 // pred_check_branch
          %553 = sbr.rel (%p551) target = $region48
        $region47: #{tpu_custom_call.1} parent=43 // pred_region
          %s554 = sand.u32 %s83, 1
          %s555 = scalar_lea.sflag [#allocation4], %s554
          %s556 = sand.u32 %s83, 1
          %s557 = smul.addr %s556, 128
          %s558 = scalar_lea.vmem [#allocation7], %s557
          %559 = dma.done %s555, 2048
        $region48: #{tpu_custom_call.1} parent=43 // pred_fallthru
          _
      $region44: #{tpu_custom_call.1} parent=5 // pred_fallthru
        _
    $region6: #{tpu_custom_call.1} parent=1 // loop_footer
      %s21 = sadd.s32 1, %s17
    $region7: #{tpu_custom_call.1} parent=1 // loop_footer_branch
      %16 = sbr.rel target = $region3
    $region8: #{tpu_custom_call.1} parent=1 // loop_exit
      _
    %560 = vsyncpa [#allocation3], 1
    %s561 = scalar_lea.sflag [#allocation3], 1
    %562 = vsyncpa %s561, 1
    %563 = vsyncpa [#allocation6], 1
    %s564 = scalar_lea.sflag [#allocation6], 1
    %565 = vsyncpa %s564, 1
    %566 = vsyncpa [#allocation4], 1
    %s567 = scalar_lea.sflag [#allocation4], 1
    %568 = vsyncpa %s567, 1

</llo_original>
